<compile_context>
chip_gen: v7x
topology: tpu7x:2x2x1
jax: 0.10.0
libtpu: 0.0.40
codegen_flags: <defaults>
</compile_context>

<pallas_src>
import jax
import jax.numpy as jnp
from jax.experimental import pallas as pl
from jax.experimental.pallas import tpu as pltpu

_LANE = 128
_TARGET_TILE_BYTES = 2 * 1024 * 1024  # ~2 MiB per block buffer


def _param_act_kernel(w_ref, x_ref, o_ref):
    # w_ref: SMEM (1,) scalar weight (f32); x_ref/o_ref: VMEM (tile_r, 128).
    w = w_ref[0]
    x = x_ref[...].astype(jnp.float32)
    # (1 - w) * relu(x) + w * x  ==  x where x >= 0, else w * x
    o_ref[...] = jnp.where(x >= 0.0, x, w * x).astype(o_ref.dtype)


def param_activation(x, weight):
    """(1 - weight) * relu(x) + weight * x with scalar weight of shape (1,)."""
    # TODO(synk): num_parameters > 1 (per-last-dim weight vector) not implemented;
    # the module default (num_parameters=1, scalar broadcast) is what is supported.
    orig_shape = x.shape
    orig_dtype = x.dtype
    itemsize = jnp.dtype(orig_dtype).itemsize
    # dtype-aware sublane multiple: 8 (f32), 16 (bf16/f16), 32 (int8/fp8)
    sub = {4: 8, 2: 16, 1: 32}.get(itemsize, 8)

    total = x.size
    xf = x.reshape(-1)
    pad = (-total) % _LANE
    if pad:  # at most 127 elements; aligned inputs skip this HBM pass entirely
        xf = jnp.pad(xf, (0, pad))
    rows = xf.size // _LANE
    x2 = xf.reshape(rows, _LANE)

    # Large row tile (~2 MiB/buffer). Small arrays use the full extent
    # (always a legal block shape); big arrays get a sub-aligned tile and a
    # cdiv grid whose partial edge block Pallas masks automatically.
    target_rows = max(sub, _TARGET_TILE_BYTES // (_LANE * itemsize))
    target_rows = max(sub, (target_rows // sub) * sub)
    if rows <= target_rows:
        tile_r = rows          # full extent -> single block, trivially valid
    else:
        tile_r = target_rows   # multiple of `sub`, satisfies (8,128) tiling
    grid = (pl.cdiv(rows, tile_r),)

    w32 = weight.reshape(-1)[:1].astype(jnp.float32)

    out2 = pl.pallas_call(
        _param_act_kernel,
        out_shape=jax.ShapeDtypeStruct((rows, _LANE), orig_dtype),
        grid=grid,
        in_specs=[
            pl.BlockSpec(memory_space=pltpu.MemorySpace.SMEM),   # scalar weight
            pl.BlockSpec((tile_r, _LANE), lambda i: (i, 0)),     # input tile
        ],
        out_specs=pl.BlockSpec((tile_r, _LANE), lambda i: (i, 0)),
        compiler_params=pltpu.CompilerParams(
            dimension_semantics=("parallel",),
            vmem_limit_bytes=32 * 1024 * 1024,
        ),
    )(w32, x2)

    out = out2.reshape(-1)
    if pad:
        out = out[:total]
    return out.reshape(orig_shape)


if __name__ == "__main__":
    # Deterministic setup (synthetic, no checkpoint load).
    num_parameters = 1
    alpha = 0.25  # non-trivial alpha so the blend is exercised (default 1.0 is identity)
    weight = jnp.full((num_parameters,), alpha, dtype=jnp.float32)

    key = jax.random.PRNGKey(0)
    x = jax.random.normal(key, (2, 4, 16, 16), dtype=jnp.float32)  # NCHW

    out = param_activation(x, weight)
    out = jax.block_until_ready(out)

    # Reference (plain JAX) check of the module's forward semantics.
    ref = (1.0 - weight[0]) * jnp.maximum(x, 0.0) + weight[0] * x
    assert out.shape == x.shape and out.dtype == x.dtype
    assert jnp.allclose(out, ref, atol=1e-6, rtol=1e-6)

    print("KERNEL_OK")
</pallas_src>

<mosaic_0001>
module attributes {stable_mosaic.version = 11 : i64} {
  func.func @_param_act_kernel(%arg0: i32, %arg1: memref<1xf32, #tpu.memory_space<smem>>, %arg2: memref<16x128xf32, #tpu.memory_space<vmem>>, %arg3: memref<16x128xf32, #tpu.memory_space<vmem>>) attributes {dimension_semantics = [#tpu.dimension_semantics<parallel>], iteration_bounds = array<i64: 1>, scalar_prefetch = 0 : i64, scratch_operands = 0 : i64, tpu.core_type = #tpu.core_type<tc>, window_params = [{transform_indices = @transform_0, window_bounds = array<i64: 1>}, {transform_indices = @transform_1, window_bounds = array<i64: 16, 128>}, {transform_indices = @transform_2, window_bounds = array<i64: 16, 128>}]} {
    %c0 = arith.constant 0 : index
    %0 = memref.load %arg1[%c0] : memref<1xf32, #tpu.memory_space<smem>>
    %c0_0 = arith.constant 0 : index
    %c0_1 = arith.constant 0 : index
    %1 = vector.load %arg2[%c0_0, %c0_1] : memref<16x128xf32, #tpu.memory_space<vmem>>, vector<16x128xf32>
    %cst = arith.constant 0.000000e+00 : f32
    %2 = vector.broadcast %cst : f32 to vector<16x128xf32>
    %3 = arith.cmpf oge, %1, %2 : vector<16x128xf32>
    %4 = vector.broadcast %0 : f32 to vector<16x128xf32>
    %5 = arith.mulf %4, %1 : vector<16x128xf32>
    %6 = arith.select %3, %1, %5 : vector<16x128xi1>, vector<16x128xf32>
    %c0_2 = arith.constant 0 : index
    %c0_3 = arith.constant 0 : index
    %7 = vector.load %arg3[%c0_2, %c0_3] : memref<16x128xf32, #tpu.memory_space<vmem>>, vector<16x128xf32>
    tpu.vector_store %arg3[%c0_2, %c0_3], %6 {strides = array<i32>} : memref<16x128xf32, #tpu.memory_space<vmem>>, vector<16x128xf32>,
    return
  }
  func.func @transform_0(%arg0: i32) -> i32 {
    %c0_i32 = arith.constant 0 : i32
    %c0_i32_0 = arith.constant 0 : i32
    return %c0_i32 : i32
  }
  func.func @transform_1(%arg0: i32) -> (i32, i32) {
    %c0_i32 = arith.constant 0 : i32
    %c0_i32_0 = arith.constant 0 : i32
    return %arg0, %c0_i32 : i32, i32
  }
  func.func @transform_2(%arg0: i32) -> (i32, i32) {
    %c0_i32 = arith.constant 0 : i32
    %c0_i32_0 = arith.constant 0 : i32
    return %arg0, %c0_i32 : i32, i32
  }
}

</mosaic_0001>

<llo_original>
// kernel: tpu_custom_call.1
$region0: #{tpu_custom_call.1}
  #allocation0 [shape = 'u32[]', space=smem, size = 0x4, offset = 0x4, fixed_abs, tag = 'smem constant byte address 0x4 - core index']
  #allocation1 [shape = 'u32[144,128]{1,0:T(1,128)}', space=vmem, size = 0x12000, scoped, tag = 'internal scratch']
  #allocation2 [shape = 'f32[1]{0:T(128)S(6)}', space=smem, size = 0x200, scoped, tag = 'scoped memory for tpu_custom_call.1']
  %s0 = inlined_call_operand.<no memory space> [shape: f32[1], index: 0, kind: input, shape index: {}]
  %s1 = inlined_call_operand.hbm [shape: f32[16,128], index: 1, kind: input, shape index: {}]
  %s2 = inlined_call_operand.hbm [shape: f32[16,128], index: 2, kind: output, shape index: {}]
  %s3 = sld [smem:[#allocation0]]
  $region22: #{tpu_custom_call.1} parent=0
    _
  %s5 = ssub.s32 1, %s3
  %s6 = scalar_select 0, %s5, %s3
  %7 = sst [smem:[#allocation2]] %s0
  $region1: #{tpu_custom_call.1} parent=0
    #allocation3 [shape = 'u8[8192]{0}', space=vmem, size = 0x2000, scoped, tag = 'input window, operand 1, single buffered']
    #allocation4 [shape = 's32[1]{0}', space=sflag, size = 0x4, scoped, tag = 'scoped memory for tpu_custom_call.1']
    #allocation5 [shape = 's32[1]{0}', space=sflag, size = 0x4, scoped, tag = 'scoped memory for tpu_custom_call.1']
    #allocation6 [shape = 'u8[8192]{0}', space=vmem, size = 0x2000, scoped, tag = 'output window, operand 0, single buffered']
    %8 = vsyncpa [#allocation4], 0
    %9 = vsyncpa [#allocation5], 0
    // Predicated region
    $region2: #{tpu_custom_call.1} parent=1 // pred_check
      _
    $region3: #{tpu_custom_call.1} parent=1 // pred_check_branch
      %11 = sbr.rel (0) target = $region5
    $region4: #{tpu_custom_call.1} parent=1 // pred_region
      _
    $region5: #{tpu_custom_call.1} parent=1 // pred_fallthru
      _
    // Predicated region
    $region6: #{tpu_custom_call.1} parent=1 // pred_check
      _
    $region7: #{tpu_custom_call.1} parent=1 // pred_check_branch
      %13 = sbr.rel (0) target = $region9
    $region8: #{tpu_custom_call.1} parent=1 // pred_region
      %s15 = ssub.s32 256, 256
      %16 = vsyncadd [#allocation4], %s15
      %s17 = sshll.u32 [#allocation3], 4
      %s18 = int_to_ptr.vmem [resolvable:$true] %s17
      %23 = dma.hbm_to_vmem [thread:$0]  %s1, 256, %s18, [#allocation4], 128, 128, 8
    $region9: #{tpu_custom_call.1} parent=1 // pred_fallthru
      _
    // Predicated region
    $region10: #{tpu_custom_call.1} parent=1 // pred_check
      _
    $region11: #{tpu_custom_call.1} parent=1 // pred_check_branch
      %25 = sbr.rel (0) target = $region13
    $region12: #{tpu_custom_call.1} parent=1 // pred_region
      %26 = dma.done [#allocation4], 256
    $region13: #{tpu_custom_call.1} parent=1 // pred_fallthru
      _
    %s27 = sld [smem:[#allocation2]]
    %v28 = vld [vmem:[#allocation3] sm:$0xff]
    %v29 = vld [vmem:[#allocation3 + $0x8] sm:$0xff]
    %vm30 = vcmp.ge.f32.partialorder %v28, 0.0
    %vm31 = vcmp.ge.f32.partialorder %v29, 0.0
    %v32 = vstv %s27
    %v33 = vmul.f32 %v32, %v28
    %v34 = vmul.f32 %v32, %v29
    %v35 = vsel %vm30, %v28, %v33
    %v36 = vsel %vm31, %v29, %v34
    %37 = vst [vmem:[#allocation6] sm:$0xff] %v35
    %38 = vst [vmem:[#allocation6 + $0x8] sm:$0xff] %v36
    // Predicated region
    $region14: #{tpu_custom_call.1} parent=1 // pred_check
      _
    $region15: #{tpu_custom_call.1} parent=1 // pred_check_branch
      %40 = sbr.rel (0) target = $region17
    $region16: #{tpu_custom_call.1} parent=1 // pred_region
      %s42 = ssub.s32 256, 256
      %43 = vsyncadd [#allocation5], %s42
      %s44 = sshll.u32 [#allocation6], 4
      %s45 = int_to_ptr.vmem [resolvable:$true] %s44
      %50 = dma.vmem_to_hbm [thread:$0]  %s45, 256, %s2, [#allocation5], 128, 128, 8
    $region17: #{tpu_custom_call.1} parent=1 // pred_fallthru
      _
    // Predicated region
    $region18: #{tpu_custom_call.1} parent=1 // pred_check
      _
    $region19: #{tpu_custom_call.1} parent=1 // pred_check_branch
      %52 = sbr.rel (0) target = $region21
    $region20: #{tpu_custom_call.1} parent=1 // pred_region
      %53 = dma.done [#allocation5], 256
    $region21: #{tpu_custom_call.1} parent=1 // pred_fallthru
      _
    %54 = vsyncpa [#allocation4], 1
    %55 = vsyncpa [#allocation5], 1

</llo_original>
